<compile_context>
chip_gen: v6e
topology: v6e:2x2x1
jax: 0.10.0
libtpu: 0.0.40
codegen_flags: <defaults>
</compile_context>

<pallas_src>
import functools

import jax
import jax.numpy as jnp
from jax.experimental import pallas as pl
from jax.experimental.pallas import tpu as pltpu


_MIN_SPLIT_BYTES = 2 << 20   # arrays >= this always get a multi-step grid
_MIN_GRID_STEPS = 4          # >= 2 * TensorCores on v7x; keeps the DMA pipeline busy
_MAX_PACK = 16               # max (n,c) rows packed per lane-row when H*W < 128


def _round_up(a, b):
    return ((a + b - 1) // b) * b


def _sublane_multiple(itemsize):
    # 8 rows for 32-bit, 16 for 16-bit, 32 for 8-bit dtypes (sublane packing).
    return max(8, 32 // max(1, itemsize))


def _chip_target_bytes():
    """Per-generation x-block byte target (HBM roofline vs ~0.35us/step overhead)."""
    kind = ""
    try:
        kind = jax.devices()[0].device_kind.lower()
    except Exception:
        pass
    if "v7" in kind:
        return 8 << 20            # ~3.2 TB/s per TC: keep per-step overhead < ~8%
    if "v6" in kind:
        return 6 << 20            # ~1.4 TB/s
    if "v5 lite" in kind or "v5e" in kind or "v5lite" in kind:
        return 2 << 20            # ~0.82 TB/s, only 16 MiB default scoped VMEM
    try:
        # Fallback: a small (<= 64 MiB) VMEM capacity indicates a v7x-class part.
        if int(pltpu.get_tpu_info().vmem_capacity_bytes) <= (64 << 20):
            return 8 << 20
    except Exception:
        pass
    return 4 << 20


def _choose_tiles(rows, width, itemsize, mult, target_bytes, total_bytes):
    """Pick (row_tile, col_tile) for the (rows, width) lane-dense slab."""
    row_bytes = width * itemsize
    # Column (lane) tiling when even the minimum-height block blows the target
    # (huge spatial maps) -- keeps blocks ~target and 2-deep pipelining intact.
    if width > 128 and mult * row_bytes > target_bytes:
        tc = (target_bytes // (mult * itemsize)) // 128 * 128
        tc = max(128, tc)
        tr = rows if rows < mult else mult
        return tr, tc
    tc = width
    # A (tr, 2k) f32 param block is lane-padded to 128 in VMEM: 512 B per row,
    # so budget rows on (x row + padded param row) to cap tr when width is small.
    tr = max(1, target_bytes // (row_bytes + 512))
    if total_bytes >= _MIN_SPLIT_BYTES:
        # Keep >= ~4 grid steps so pipelining / v7x megacore actually engage.
        tr = min(tr, _round_up(pl.cdiv(rows, _MIN_GRID_STEPS), mult))
    if tr >= rows:
        return rows, tc            # truly tiny input: one block is fine
    tr = max(mult, (tr // mult) * mult)
    return min(tr, rows), tc


def _fbn_kernel(params_ref, x_ref, o_ref, *, k, rw):
    """y = x * scale + shift with per-row (k == 1) or per-lane-group (k > 1) params."""
    p = params_ref[...]                               # (TR, 2k) f32: [scales | shifts]
    x = x_ref[...].astype(jnp.float32)                # (TR, TC) lane-dense tile
    scale = jnp.broadcast_to(p[:, 0:1], x.shape)
    shift = jnp.broadcast_to(p[:, k:k + 1], x.shape)
    if k > 1:
        # H*W < 128: k (n, c) rows share one lane-row; pick each sub-row's affine
        # with an exact, short VPU select chain (memory-bound kernel => free slack).
        lane = jax.lax.broadcasted_iota(jnp.int32, x.shape, 1)
        for i in range(1, k):
            m = (lane >= i * rw) & (lane < (i + 1) * rw)
            scale = jnp.where(m, jnp.broadcast_to(p[:, i:i + 1], x.shape), scale)
            shift = jnp.where(m, jnp.broadcast_to(p[:, k + i:k + i + 1], x.shape), shift)
    o_ref[...] = (x * scale + shift).astype(o_ref.dtype)


def frozen_batchnorm2d(x, weight, bias, running_mean, running_var, eps=0.0,
                       *, target_block_bytes=None, donate_x=False):
    """Frozen (inference-mode) BatchNorm2d on NCHW input.

    Matches the reference module's forward:
        scale = weight * running_var.rsqrt()
        shift = bias - running_mean * scale
        y     = x * scale[None, :, None, None] + shift[None, :, None, None]

    `eps` defaults to 0.0 to match this exact module (torchvision's variant uses
    eps=1e-5; pass it explicitly if wanted -- note eps=0 with a zero running_var
    yields inf/NaN, exactly like the PyTorch module).  The parameter fold and
    elementwise math are done in float32 regardless of x.dtype (tighter numerics
    than PyTorch's half-cast path); only the output is cast back to x.dtype.
    `target_block_bytes` overrides the generation-aware tile-size target (tests).
    `donate_x=True` aliases x's buffer to the output (caller must not reuse x).
    """
    N, C, H, W = x.shape
    rows, rw = N * C, H * W
    itemsize = jnp.dtype(x.dtype).itemsize
    total_bytes = rows * rw * itemsize
    mult = _sublane_multiple(itemsize)
    target = int(target_block_bytes) if target_block_bytes else _chip_target_bytes()

    # --- fold the frozen statistics into a per-channel affine, in f32 ---
    scale = weight.astype(jnp.float32) * jax.lax.rsqrt(
        running_var.astype(jnp.float32) + jnp.float32(eps))
    shift = bias.astype(jnp.float32) - running_mean.astype(jnp.float32) * scale
    scale_rows = jnp.broadcast_to(scale[None, :], (N, C)).reshape(rows)
    shift_rows = jnp.broadcast_to(shift[None, :], (N, C)).reshape(rows)

    # --- lane packing: when H*W < 128, pack k (n, c) rows per slab row so the
    # store lane-fill improves from rw/128 to k*rw/128 (masked vst is the
    # bottleneck for small spatial maps) ---
    k = 128 // rw if rw < 128 else 1
    if not (2 <= k <= _MAX_PACK and rows % k == 0):
        k = 1
    rows_p, width = rows // k, k * rw

    # Fused per-row params: one (rows_p, 2k) f32 input -> one DMA stream and one
    # lane-padded VMEM block instead of two.
    params = jnp.concatenate(
        [scale_rows.reshape(rows_p, k), shift_rows.reshape(rows_p, k)], axis=1)

    x2 = x.reshape(rows_p, width)          # zero-copy view of contiguous NCHW

    tr, tc = _choose_tiles(rows_p, width, itemsize, mult, target, total_bytes)
    grid = (pl.cdiv(rows_p, tr), pl.cdiv(width, tc))

    # --- explicit scoped-VMEM budget: (in + out) double-buffered x blocks plus
    # the lane-padded (tr, 2k)->(tr, 128) f32 param buffers, with slack.
    # Capped at 48 MiB so it always fits v7x's 64 MiB physical VMEM. ---
    x_blk = tr * tc * itemsize
    p_blk = tr * 128 * 4
    needed = 4 * x_blk + 2 * p_blk + (4 << 20)
    vmem_limit = int(min(48 << 20, max(32 << 20, needed)))

    cost = pl.CostEstimate(
        flops=2 * rows * rw,
        transcendentals=0,
        bytes_accessed=2 * total_bytes + rows_p * 2 * k * 4)

    kernel = functools.partial(_fbn_kernel, k=k, rw=rw)
    out2 = pl.pallas_call(
        kernel,
        out_shape=jax.ShapeDtypeStruct((rows_p, width), x.dtype),
        grid=grid,
        in_specs=[
            pl.BlockSpec((tr, 2 * k), lambda i, j: (i, 0)),   # fused affine params
            pl.BlockSpec((tr, tc), lambda i, j: (i, j)),      # x row/col tile
        ],
        out_specs=pl.BlockSpec((tr, tc), lambda i, j: (i, j)),
        compiler_params=pltpu.CompilerParams(
            dimension_semantics=("parallel", "parallel"),
            vmem_limit_bytes=vmem_limit),
        cost_estimate=cost,
        input_output_aliases={1: 0} if donate_x else {},
    )(params, x2)

    return out2.reshape(N, C, H, W)


def _reference(x, weight, bias, running_mean, running_var, eps=0.0):
    scale = weight.astype(jnp.float32) * jax.lax.rsqrt(
        running_var.astype(jnp.float32) + jnp.float32(eps))
    shift = bias.astype(jnp.float32) - running_mean.astype(jnp.float32) * scale
    y = (x.astype(jnp.float32) * scale.reshape(1, -1, 1, 1)
         + shift.reshape(1, -1, 1, 1))
    return y.astype(x.dtype)


if __name__ == "__main__":
    key = jax.random.PRNGKey(0)

    def make_inputs(k, n, c, h, w, dtype):
        kx, kw, kb, km, kv = jax.random.split(k, 5)
        x = jax.random.normal(kx, (n, c, h, w), dtype=jnp.float32).astype(dtype)
        weight = 1.0 + 0.1 * jax.random.normal(kw, (c,), dtype=jnp.float32)
        bias = 0.1 * jax.random.normal(kb, (c,), dtype=jnp.float32)
        mean = 0.1 * jax.random.normal(km, (c,), dtype=jnp.float32)
        var = jnp.abs(1.0 + 0.1 * jax.random.normal(kv, (c,), dtype=jnp.float32))
        return x, weight, bias, mean, var

    cases = [
        # (shape,           dtype,        block-bytes override, tolerance)
        ((2, 4, 16, 16),    jnp.float32,  None,  1e-5),  # spec shape, single block
        ((3, 37, 16, 16),   jnp.float32,  4096,  1e-5),  # 2-D grid + partial row block
        ((2, 25, 16, 16),   jnp.bfloat16, 16384, 1e-2),  # bf16, non-divisible rows/tr
        ((2, 8, 7, 7),      jnp.float32,  None,  1e-5),  # H*W < 128 lane packing (k=2)
    ]
    keys = jax.random.split(key, len(cases))
    for case_key, (shape, dtype, tgt, tol) in zip(keys, cases):
        x, w, b, m, v = make_inputs(case_key, *shape, dtype)
        out = frozen_batchnorm2d(x, w, b, m, v, target_block_bytes=tgt)
        out = jax.block_until_ready(out)
        ref = _reference(x, w, b, m, v)
        assert out.shape == x.shape and out.dtype == x.dtype, (
            f"shape/dtype mismatch for {shape} {dtype}")
        ok = jnp.allclose(out.astype(jnp.float32), ref.astype(jnp.float32),
                          atol=tol, rtol=tol)
        assert bool(ok), f"mismatch vs reference for shape={shape} dtype={dtype}"

    print("KERNEL_OK")
</pallas_src>

<mosaic_0001>
module attributes {stable_mosaic.version = 11 : i64} {
  func.func @_fbn_kernel(%arg0: i32, %arg1: i32, %arg2: memref<8x2xf32, #tpu.memory_space<vmem>>, %arg3: memref<8x256xf32, #tpu.memory_space<vmem>>, %arg4: memref<8x256xf32, #tpu.memory_space<vmem>>) attributes {dimension_semantics = [#tpu.dimension_semantics<parallel>, #tpu.dimension_semantics<parallel>], iteration_bounds = array<i64: 1, 1>, scalar_prefetch = 0 : i64, scratch_operands = 0 : i64, tpu.core_type = #tpu.core_type<tc>, window_params = [{transform_indices = @transform_0, window_bounds = array<i64: 8, 2>}, {transform_indices = @transform_1, window_bounds = array<i64: 8, 256>}, {transform_indices = @transform_2, window_bounds = array<i64: 8, 256>}]} {
    %c0 = arith.constant 0 : index
    %c0_0 = arith.constant 0 : index
    %0 = vector.load %arg2[%c0, %c0_0] : memref<8x2xf32, #tpu.memory_space<vmem>>, vector<8x2xf32>
    %c0_1 = arith.constant 0 : index
    %c0_2 = arith.constant 0 : index
    %1 = vector.load %arg3[%c0_1, %c0_2] : memref<8x256xf32, #tpu.memory_space<vmem>>, vector<8x256xf32>
    %2 = vector.extract_strided_slice %0 {offsets = [0, 0], sizes = [8, 1], strides = [1, 1]} : vector<8x2xf32> to vector<8x1xf32>
    %3 = vector.shape_cast %2 : vector<8x1xf32> to vector<8x1xf32>
    %4 = vector.broadcast %3 : vector<8x1xf32> to vector<8x256xf32>
    %5 = vector.extract_strided_slice %0 {offsets = [0, 1], sizes = [8, 1], strides = [1, 1]} : vector<8x2xf32> to vector<8x1xf32>
    %6 = vector.shape_cast %5 : vector<8x1xf32> to vector<8x1xf32>
    %7 = vector.broadcast %6 : vector<8x1xf32> to vector<8x256xf32>
    %8 = arith.mulf %1, %4 : vector<8x256xf32>
    %9 = arith.addf %8, %7 : vector<8x256xf32>
    %c0_3 = arith.constant 0 : index
    %c0_4 = arith.constant 0 : index
    %10 = vector.load %arg4[%c0_3, %c0_4] : memref<8x256xf32, #tpu.memory_space<vmem>>, vector<8x256xf32>
    tpu.vector_store %arg4[%c0_3, %c0_4], %9 {strides = array<i32>} : memref<8x256xf32, #tpu.memory_space<vmem>>, vector<8x256xf32>,
    return
  }
  func.func @transform_0(%arg0: i32, %arg1: i32) -> (i32, i32) {
    %c0_i32 = arith.constant 0 : i32
    %c0_i32_0 = arith.constant 0 : i32
    return %arg0, %c0_i32 : i32, i32
  }
  func.func @transform_1(%arg0: i32, %arg1: i32) -> (i32, i32) {
    %c0_i32 = arith.constant 0 : i32
    return %arg0, %arg1 : i32, i32
  }
  func.func @transform_2(%arg0: i32, %arg1: i32) -> (i32, i32) {
    %c0_i32 = arith.constant 0 : i32
    return %arg0, %arg1 : i32, i32
  }
}

</mosaic_0001>

<llo_original>
// kernel: tpu_custom_call.1
$region0: #{tpu_custom_call.1}
  #allocation0 [shape = 'u32[]', space=smem, size = 0x4, offset = 0x4, fixed_abs, tag = 'smem constant byte address 0x4 - core index']
  #allocation1 [shape = 'u32[144,128]{1,0:T(1,128)}', space=vmem, size = 0x12000, scoped, tag = 'internal scratch']
  %s0 = inlined_call_operand.vmem [shape: f32[8,2], index: 0, kind: input, shape index: {}]
  %s1 = inlined_call_operand.hbm [shape: f32[8,256], index: 1, kind: input, shape index: {}]
  %s2 = inlined_call_operand.hbm [shape: f32[8,256], index: 2, kind: output, shape index: {}]
  %s3 = sld [smem:[#allocation0]]
  $region22: #{tpu_custom_call.1} parent=0
    _
  %s5 = ssub.s32 1, %s3
  %s6 = scalar_select 0, %s5, %s3
  $region1: #{tpu_custom_call.1} parent=0
    #allocation2 [shape = 'u8[8192]{0}', space=vmem, size = 0x2000, scoped, tag = 'input window, operand 1, single buffered']
    #allocation3 [shape = 's32[1]{0}', space=sflag, size = 0x4, scoped, tag = 'scoped memory for tpu_custom_call.1']
    #allocation4 [shape = 's32[1]{0}', space=sflag, size = 0x4, scoped, tag = 'scoped memory for tpu_custom_call.1']
    #allocation5 [shape = 'u8[8192]{0}', space=vmem, size = 0x2000, scoped, tag = 'output window, operand 0, single buffered']
    %7 = vsyncpa [#allocation3], 0
    %8 = vsyncpa [#allocation4], 0
    // Predicated region
    $region2: #{tpu_custom_call.1} parent=1 // pred_check
      _
    $region3: #{tpu_custom_call.1} parent=1 // pred_check_branch
      %10 = sbr.rel (0) target = $region5
    $region4: #{tpu_custom_call.1} parent=1 // pred_region
      _
    $region5: #{tpu_custom_call.1} parent=1 // pred_fallthru
      _
    // Predicated region
    $region6: #{tpu_custom_call.1} parent=1 // pred_check
      _
    $region7: #{tpu_custom_call.1} parent=1 // pred_check_branch
      %12 = sbr.rel (0) target = $region9
    $region8: #{tpu_custom_call.1} parent=1 // pred_region
      %s14 = ssub.s32 256, 256
      %15 = vsyncadd [#allocation3], %s14
      %s17 = sshll.u32 [#allocation2], 4
      %s18 = int_to_ptr.vmem [resolvable:$true] %s17
      %20 = dma.hbm_to_vmem [thread:$0]  %s1, 256, %s18, [#allocation3]
    $region9: #{tpu_custom_call.1} parent=1 // pred_fallthru
      _
    // Predicated region
    $region10: #{tpu_custom_call.1} parent=1 // pred_check
      _
    $region11: #{tpu_custom_call.1} parent=1 // pred_check_branch
      %22 = sbr.rel (0) target = $region13
    $region12: #{tpu_custom_call.1} parent=1 // pred_region
      %23 = dma.done [#allocation3], 256
    $region13: #{tpu_custom_call.1} parent=1 // pred_fallthru
      _
    %v24 = vld [vmem:[%s0] sm:$0xff]
    %v25 = vld [vmem:[#allocation2] sm:$0xff]
    %v26 = vld [vmem:[#allocation2 + $0x8] sm:$0xff]
    %28 = vset.pattern.permute.xlu0 0
    %29 = vperm.xlu0 %28, %v24
    %v30 = vpop.permute.xlu0 %29
    %32 = vset.pattern.permute.xlu0 1
    %33 = vperm.xlu0 %32, %v24
    %v34 = vpop.permute.xlu0 %33
    %v36 = vmul.f32 %v25, %v30
    %v37 = vmul.f32 %v26, %v30
    %v38 = vadd.f32 %v36, %v34
    %v39 = vadd.f32 %v37, %v34
    %40 = vst [vmem:[#allocation5] sm:$0xff] %v38
    %41 = vst [vmem:[#allocation5 + $0x8] sm:$0xff] %v39
    // Predicated region
    $region14: #{tpu_custom_call.1} parent=1 // pred_check
      _
    $region15: #{tpu_custom_call.1} parent=1 // pred_check_branch
      %43 = sbr.rel (0) target = $region17
    $region16: #{tpu_custom_call.1} parent=1 // pred_region
      %s45 = ssub.s32 256, 256
      %46 = vsyncadd [#allocation4], %s45
      %s48 = sshll.u32 [#allocation5], 4
      %s49 = int_to_ptr.vmem [resolvable:$true] %s48
      %51 = dma.vmem_to_hbm [thread:$0]  %s49, 256, %s2, [#allocation4]
    $region17: #{tpu_custom_call.1} parent=1 // pred_fallthru
      _
    // Predicated region
    $region18: #{tpu_custom_call.1} parent=1 // pred_check
      _
    $region19: #{tpu_custom_call.1} parent=1 // pred_check_branch
      %53 = sbr.rel (0) target = $region21
    $region20: #{tpu_custom_call.1} parent=1 // pred_region
      %54 = dma.done [#allocation4], 256
    $region21: #{tpu_custom_call.1} parent=1 // pred_fallthru
      _
    %55 = vsyncpa [#allocation3], 1
    %56 = vsyncpa [#allocation4], 1

</llo_original>
